<compile_context>
chip_gen: v7x
topology: tpu7x:2x2x1
jax: 0.10.0
libtpu: 0.0.40
codegen_flags: <defaults>
</compile_context>

<pallas_src>
import jax
import jax.numpy as jnp
from jax import lax
from jax.experimental import pallas as pl
from jax.experimental.pallas import tpu as pltpu


def _round_up(x, m):
    return (x + m - 1) // m * m


def _pick_tile(dim, target, unit):
    """Largest multiple of `unit` <= min(dim, target) that divides `dim` (avoids padding the
    M/N axes and the post-kernel slice copy); falls back to min(dim, target) if none divides."""
    t = max(unit, min(dim, (target // unit) * unit))
    if dim % t == 0:
        return t
    for cand in range(t, unit - 1, -unit):
        if dim % cand == 0:
            return cand
    return t


def _pad_gates(w, h, hp):
    """Pad the trailing 4*h axis to 4*hp, padding each gate (i,f,g,o) block separately."""
    lead = w.shape[:-1]
    w4 = w.reshape(*lead, 4, h)
    pad = [(0, 0)] * len(lead) + [(0, 0), (0, hp - h)]
    return jnp.pad(w4, pad).reshape(*lead, 4 * hp)


def _compiler_params(dimension_semantics, vmem_need_bytes):
    kw = dict(dimension_semantics=dimension_semantics)
    if vmem_need_bytes > (32 << 20):
        # Only override the default scoped limit when the footprint actually requires it;
        # cap with headroom so large-H configs still fit v7x's 64 MiB physical VMEM budget.
        kw["vmem_limit_bytes"] = int(min(vmem_need_bytes + (8 << 20), 112 << 20))
    return pltpu.CompilerParams(**kw)


# ---------------- stages 1 & 3: tiled matmul + bias (parallel grid) ----------------

def _matmul_bias_kernel(a_ref, b_ref, bias_ref, o_ref):
    acc = jnp.dot(a_ref[...], b_ref[...], preferred_element_type=jnp.float32)
    o_ref[...] = (acc + bias_ref[...]).astype(o_ref.dtype)


def matmul_bias(a, b, bias, *, tm_target=512, tn_target=512, out_dtype=jnp.float32):
    """a:(M,K) bf16, b:(K,N) bf16, bias:(1,N) f32 -> (M,N) out_dtype.  K kept whole."""
    M, K = a.shape
    N = b.shape[1]
    assert K % 128 == 0, "K must be lane-aligned (pad to a multiple of 128 before calling)"
    tm = _pick_tile(M, tm_target, 8)
    tn = _pick_tile(N, tn_target, 128)
    Mp, Np = _round_up(M, tm), _round_up(N, tn)
    if Mp != M:
        a = jnp.pad(a, ((0, Mp - M), (0, 0)))
    if Np != N:
        b = jnp.pad(b, ((0, 0), (0, Np - N)))
        bias = jnp.pad(bias, ((0, 0), (0, Np - N)))

    out_itemsize = jnp.dtype(out_dtype).itemsize
    vmem_need = 2 * (tm * K * a.dtype.itemsize + K * tn * b.dtype.itemsize
                     + tn * bias.dtype.itemsize + tm * tn * out_itemsize)

    out = pl.pallas_call(
        _matmul_bias_kernel,
        out_shape=jax.ShapeDtypeStruct((Mp, Np), out_dtype),
        grid=(Mp // tm, Np // tn),
        in_specs=[
            pl.BlockSpec((tm, K), lambda i, j: (i, 0)),
            pl.BlockSpec((K, tn), lambda i, j: (0, j)),
            pl.BlockSpec((1, tn), lambda i, j: (0, j)),
        ],
        out_specs=pl.BlockSpec((tm, tn), lambda i, j: (i, j)),
        compiler_params=_compiler_params(("parallel", "parallel"), vmem_need),
    )(a, b, bias)
    if Mp != M or Np != N:
        out = out[:M, :N]
    return out


# ------------- stage 2: fused LSTM recurrence (one kernel, in-body T loop) ----------

def _lstm_seq_kernel(gx_ref, whh_ref, h_out_ref, h_sc, c_sc):
    # gx_ref: (T, Bb, 4Hp) bf16 resident; whh_ref: (Hp, 4Hp) bf16 resident;
    # h_out_ref: (T, Bb, Hp) bf16; h_sc/c_sc: (Bb, Hp) f32 state.
    T = gx_ref.shape[0]
    Hp = h_sc.shape[1]
    h_sc[...] = jnp.zeros_like(h_sc)   # nn.LSTM default zero-initialized (h0, c0)
    c_sc[...] = jnp.zeros_like(c_sc)
    w = whh_ref[...]                   # hoisted: resident recurrent weight

    def step(t, carry):
        h = h_sc[...]
        c = c_sc[...]
        # Input-to-hidden contribution (+ combined bias) was hoisted into stage 1; only
        # the small recurrent matmul and the gate math remain inside the serial loop.
        gates = gx_ref[t].astype(jnp.float32) + jnp.dot(
            h.astype(w.dtype), w, preferred_element_type=jnp.float32)

        i_g = jax.nn.sigmoid(gates[:, 0 * Hp:1 * Hp])   # PyTorch gate order i, f, g, o
        f_g = jax.nn.sigmoid(gates[:, 1 * Hp:2 * Hp])
        g_g = jnp.tanh(gates[:, 2 * Hp:3 * Hp])
        o_g = jax.nn.sigmoid(gates[:, 3 * Hp:4 * Hp])

        c_new = f_g * c + i_g * g_g
        h_new = o_g * jnp.tanh(c_new)

        h_sc[...] = h_new
        c_sc[...] = c_new
        h_out_ref[t] = h_new.astype(h_out_ref.dtype)
        return carry

    lax.fori_loop(0, T, step, 0)


def lstm_recurrence(gates_x, w_hh_t_bf16, *, num_batch_blocks=None):
    """gates_x:(T,Bp,4Hp) bf16, w_hh_t:(Hp,4Hp) bf16 -> H_all:(T,Bp,Hp) bf16."""
    T, Bp, G = gates_x.shape
    Hp = G // 4
    if num_batch_blocks is None:
        # v7x has 2 TensorCores: split the batch across them when it is large enough;
        # on 1-TC chips the extra grid step is a negligible (~0.35 us) overhead.
        num_batch_blocks = 2 if Bp % 16 == 0 else 1
    nb = num_batch_blocks
    assert Bp % nb == 0 and (Bp // nb) % 8 == 0
    Bb = Bp // nb

    # Conservative (double-buffered) resident VMEM footprint for this kernel.
    vmem_need = (2 * (T * Bb * G + T * Bb * Hp) * gates_x.dtype.itemsize
                 + 2 * Hp * G * w_hh_t_bf16.dtype.itemsize
                 + 2 * Bb * Hp * 4)

    return pl.pallas_call(
        _lstm_seq_kernel,
        out_shape=jax.ShapeDtypeStruct((T, Bp, Hp), jnp.bfloat16),
        grid=(nb,),
        in_specs=[
            pl.BlockSpec((T, Bb, G), lambda b: (0, b, 0)),
            pl.BlockSpec((Hp, G), lambda b: (0, 0)),     # same weight block on every core
        ],
        out_specs=pl.BlockSpec((T, Bb, Hp), lambda b: (0, b, 0)),
        scratch_shapes=[
            pltpu.VMEM((Bb, Hp), jnp.float32),   # h
            pltpu.VMEM((Bb, Hp), jnp.float32),   # c
        ],
        compiler_params=_compiler_params(("parallel",), vmem_need),
    )(gates_x, w_hh_t_bf16)


# ------------------------------- forward wrapper ------------------------------------

def decoder_rnn_forward(features, captions, params):
    """
    features: (B, E) float32   -- image feature vector
    captions: (B, S) int32     -- token ids
    returns : (B, S, V) float32 logits (T = 1 + (S-1) = S LSTM steps, like the PyTorch module)
    """
    emb_table = params["embed"]      # (V, E)
    w_ih_t = params["w_ih_t"]        # (E, 4H)
    w_hh_t = params["w_hh_t"]        # (H, 4H)
    bias = params["b"]               # (1, 4H) == b_ih + b_hh
    w_fc_t = params["w_fc_t"]        # (H, V)
    b_fc = params["b_fc"]            # (1, V)

    B, E = features.shape
    H = w_hh_t.shape[0]
    V = w_fc_t.shape[1]
    T = captions.shape[1]

    Bp = _round_up(B, 8)
    Ep = _round_up(E, 128)
    Hp = _round_up(H, 128)
    Vp = _round_up(V, 128)

    # glue (XLA): embedding gather, concat, time-major transpose, padding
    cap_emb = jnp.take(emb_table, captions[:, :-1], axis=0)             # (B, T-1, E)
    inputs = jnp.concatenate([features[:, None, :], cap_emb], axis=1)   # (B, T, E)
    x_tm = jnp.transpose(inputs, (1, 0, 2))                             # (T, B, E)
    x_tm = jnp.pad(x_tm, ((0, 0), (0, Bp - B), (0, Ep - E)))
    x2d = x_tm.reshape(T * Bp, Ep).astype(jnp.bfloat16)

    # padded / gate-aligned weights: bf16 matmul operands, f32 biases
    wih_p = _pad_gates(jnp.pad(w_ih_t, ((0, Ep - E), (0, 0))), H, Hp).astype(jnp.bfloat16)
    whh_p = _pad_gates(jnp.pad(w_hh_t, ((0, Hp - H), (0, 0))), H, Hp).astype(jnp.bfloat16)
    b_p = _pad_gates(bias, H, Hp).astype(jnp.float32)
    wfc_p = jnp.pad(w_fc_t, ((0, Hp - H), (0, Vp - V))).astype(jnp.bfloat16)
    bfc_p = jnp.pad(b_fc, ((0, 0), (0, Vp - V))).astype(jnp.float32)

    # stage 1: hoisted input-to-hidden matmul (+ combined bias) over all T*B rows, bf16 out
    gates_x = matmul_bias(x2d, wih_p, b_p, tm_target=512,
                          out_dtype=jnp.bfloat16).reshape(T, Bp, 4 * Hp)

    # stage 2: fused serial recurrence (single invocation; only h @ W_hh^T + gates per step)
    h_all = lstm_recurrence(gates_x, whh_p)                             # (T, Bp, Hp) bf16

    # stage 3: hoisted FC vocab projection over all (batch, time) rows; large M tiles so
    # the vocab weight is re-streamed rarely.  Only the small bf16 (T,B,H) tensor is
    # transposed, never the (B,T,V) logits.
    h_bt = jnp.transpose(h_all, (1, 0, 2)).reshape(Bp * T, Hp)          # bf16
    logits = matmul_bias(h_bt, wfc_p, bfc_p, tm_target=1024, tn_target=512).reshape(Bp, T, Vp)
    # TODO(synk): emit bf16 logits (or fuse softmax/argmax) if the downstream consumer allows;
    # kept f32 here to match the PyTorch module's output dtype.
    return logits[:B, :, :V]


# ------------------------------- params & reference ---------------------------------

def init_params(key, embed_size, hidden_size, vocab_size):
    """Deterministic synthetic init (uniform +-1/sqrt(H), like PyTorch defaults)."""
    ks = jax.random.split(key, 7)
    k = 1.0 / jnp.sqrt(jnp.float32(hidden_size))
    u = lambda kk, shape: jax.random.uniform(kk, shape, jnp.float32, -k, k)
    embed = jax.random.normal(ks[0], (vocab_size, embed_size), jnp.float32)
    w_ih = u(ks[1], (4 * hidden_size, embed_size))   # PyTorch layout (4H, E)
    w_hh = u(ks[2], (4 * hidden_size, hidden_size))  # (4H, H)
    b_ih = u(ks[3], (4 * hidden_size,))
    b_hh = u(ks[4], (4 * hidden_size,))
    w_fc = u(ks[5], (vocab_size, hidden_size))       # (V, H)
    b_fc = u(ks[6], (vocab_size,))
    return {
        "embed": embed,
        "w_ih_t": w_ih.T,                             # (E, 4H)
        "w_hh_t": w_hh.T,                             # (H, 4H)
        "b": (b_ih + b_hh)[None, :],                  # (1, 4H)
        "w_fc_t": w_fc.T,                             # (H, V)
        "b_fc": b_fc[None, :],                        # (1, V)
    }
    # TODO(synk): nn.LSTM(dropout=0.3) is inter-layer only, hence a no-op for num_layers=1.


def reference_forward(features, captions, params):
    """Pure-JAX reference mirroring the kernel's bf16-operand / f32-accumulate math
    (including the bf16 storage of the hoisted gates_x intermediate)."""
    emb, wih, whh = params["embed"], params["w_ih_t"], params["w_hh_t"]
    b, wfc, bfc = params["b"], params["w_fc_t"], params["b_fc"]
    B, _ = features.shape
    H = whh.shape[0]
    cap_emb = jnp.take(emb, captions[:, :-1], axis=0)
    inputs = jnp.concatenate([features[:, None, :], cap_emb], axis=1)
    T = inputs.shape[1]
    wih_b, whh_b, wfc_b = (w.astype(jnp.bfloat16) for w in (wih, whh, wfc))
    h = jnp.zeros((B, H), jnp.float32)
    c = jnp.zeros((B, H), jnp.float32)
    outs = []
    for t in range(T):
        x_t = inputs[:, t, :].astype(jnp.bfloat16)
        gx = (jnp.dot(x_t, wih_b, preferred_element_type=jnp.float32) + b).astype(jnp.bfloat16)
        gates = gx.astype(jnp.float32) + jnp.dot(h.astype(jnp.bfloat16), whh_b,
                                                 preferred_element_type=jnp.float32)
        i_g = jax.nn.sigmoid(gates[:, 0 * H:1 * H])
        f_g = jax.nn.sigmoid(gates[:, 1 * H:2 * H])
        g_g = jnp.tanh(gates[:, 2 * H:3 * H])
        o_g = jax.nn.sigmoid(gates[:, 3 * H:4 * H])
        c = f_g * c + i_g * g_g
        h = o_g * jnp.tanh(c)
        outs.append(jnp.dot(h.astype(jnp.bfloat16), wfc_b,
                            preferred_element_type=jnp.float32) + bfc)
    return jnp.stack(outs, axis=1)


if __name__ == "__main__":
    EMBED, HIDDEN, VOCAB = 32, 32, 64
    B, S = 2, 8   # LSTM runs T = S steps (image features + S-1 embedded caption tokens)

    root = jax.random.PRNGKey(0)
    k_feat, k_cap, k_par = jax.random.split(root, 3)

    features = jax.random.normal(k_feat, (B, EMBED), jnp.float32)
    captions = jax.random.randint(k_cap, (B, S), 0, VOCAB, jnp.int32)
    params = init_params(k_par, EMBED, HIDDEN, VOCAB)

    fwd = jax.jit(decoder_rnn_forward)
    logits = fwd(features, captions, params)
    jax.block_until_ready(logits)
    assert logits.shape == (B, S, VOCAB)

    ref = reference_forward(features, captions, params)
    err = float(jnp.max(jnp.abs(logits - ref)))
    assert jnp.allclose(logits, ref, atol=5e-2, rtol=5e-2), f"max abs err {err}"

    print("KERNEL_OK")
</pallas_src>

<mosaic_0001>
module attributes {stable_mosaic.version = 11 : i64} {
  func.func @_matmul_bias_kernel(%arg0: i32, %arg1: i32, %arg2: memref<64x128xbf16, #tpu.memory_space<vmem>>, %arg3: memref<128x128xbf16, #tpu.memory_space<vmem>>, %arg4: memref<1x128xf32, #tpu.memory_space<vmem>>, %arg5: memref<64x128xf32, #tpu.memory_space<vmem>>) attributes {dimension_semantics = [#tpu.dimension_semantics<parallel>, #tpu.dimension_semantics<parallel>], iteration_bounds = array<i64: 1, 1>, scalar_prefetch = 0 : i64, scratch_operands = 0 : i64, tpu.core_type = #tpu.core_type<tc>, window_params = [{transform_indices = @transform_0, window_bounds = array<i64: 64, 128>}, {transform_indices = @transform_1, window_bounds = array<i64: 128, 128>}, {transform_indices = @transform_2, window_bounds = array<i64: 1, 128>}, {transform_indices = @transform_3, window_bounds = array<i64: 64, 128>}]} {
    %c0 = arith.constant 0 : index
    %c0_0 = arith.constant 0 : index
    %0 = vector.load %arg2[%c0, %c0_0] : memref<64x128xbf16, #tpu.memory_space<vmem>>, vector<64x128xbf16>
    %c0_1 = arith.constant 0 : index
    %c0_2 = arith.constant 0 : index
    %1 = vector.load %arg3[%c0_1, %c0_2] : memref<128x128xbf16, #tpu.memory_space<vmem>>, vector<128x128xbf16>
    %cst = arith.constant dense<0.000000e+00> : vector<64x128xf32>
    %2 = tpu.matmul %0, %1, %cst {dimension_numbers = #tpu.dot_dimension_numbers<[1], [0], [0], [1], [0, 0, 1, 1], [], []>} : vector<64x128xbf16>, vector<128x128xbf16>, vector<64x128xf32> -> vector<64x128xf32>
    %c0_3 = arith.constant 0 : index
    %c0_4 = arith.constant 0 : index
    %3 = vector.load %arg4[%c0_3, %c0_4] : memref<1x128xf32, #tpu.memory_space<vmem>>, vector<1x128xf32>
    %4 = vector.broadcast %3 : vector<1x128xf32> to vector<64x128xf32>
    %5 = arith.addf %2, %4 : vector<64x128xf32>
    %c0_5 = arith.constant 0 : index
    %c0_6 = arith.constant 0 : index
    %6 = vector.load %arg5[%c0_5, %c0_6] : memref<64x128xf32, #tpu.memory_space<vmem>>, vector<64x128xf32>
    tpu.vector_store %arg5[%c0_5, %c0_6], %5 {strides = array<i32>} : memref<64x128xf32, #tpu.memory_space<vmem>>, vector<64x128xf32>,
    return
  }
  func.func @transform_0(%arg0: i32, %arg1: i32) -> (i32, i32) {
    %c0_i32 = arith.constant 0 : i32
    %c0_i32_0 = arith.constant 0 : i32
    return %arg0, %c0_i32 : i32, i32
  }
  func.func @transform_1(%arg0: i32, %arg1: i32) -> (i32, i32) {
    %c0_i32 = arith.constant 0 : i32
    %c0_i32_0 = arith.constant 0 : i32
    return %c0_i32, %arg1 : i32, i32
  }
  func.func @transform_2(%arg0: i32, %arg1: i32) -> (i32, i32) {
    %c0_i32 = arith.constant 0 : i32
    %c0_i32_0 = arith.constant 0 : i32
    return %c0_i32, %arg1 : i32, i32
  }
  func.func @transform_3(%arg0: i32, %arg1: i32) -> (i32, i32) {
    %c0_i32 = arith.constant 0 : i32
    return %arg0, %arg1 : i32, i32
  }
}

module attributes {stable_mosaic.version = 11 : i64} {
  func.func @_matmul_bias_kernel(%arg0: i32, %arg1: i32, %arg2: memref<64x128xbf16, #tpu.memory_space<vmem>>, %arg3: memref<128x512xbf16, #tpu.memory_space<vmem>>, %arg4: memref<1x512xf32, #tpu.memory_space<vmem>>, %arg5: memref<64x512xbf16, #tpu.memory_space<vmem>>) attributes {dimension_semantics = [#tpu.dimension_semantics<parallel>, #tpu.dimension_semantics<parallel>], iteration_bounds = array<i64: 1, 1>, scalar_prefetch = 0 : i64, scratch_operands = 0 : i64, tpu.core_type = #tpu.core_type<tc>, window_params = [{transform_indices = @transform_0, window_bounds = array<i64: 64, 128>}, {transform_indices = @transform_1, window_bounds = array<i64: 128, 512>}, {transform_indices = @transform_2, window_bounds = array<i64: 1, 512>}, {transform_indices = @transform_3, window_bounds = array<i64: 64, 512>}]} {
    %c0 = arith.constant 0 : index
    %c0_0 = arith.constant 0 : index
    %0 = vector.load %arg2[%c0, %c0_0] : memref<64x128xbf16, #tpu.memory_space<vmem>>, vector<64x128xbf16>
    %c0_1 = arith.constant 0 : index
    %c0_2 = arith.constant 0 : index
    %1 = vector.load %arg3[%c0_1, %c0_2] : memref<128x512xbf16, #tpu.memory_space<vmem>>, vector<128x512xbf16>
    %cst = arith.constant dense<0.000000e+00> : vector<64x512xf32>
    %2 = tpu.matmul %0, %1, %cst {dimension_numbers = #tpu.dot_dimension_numbers<[1], [0], [0], [1], [0, 0, 1, 1], [], []>} : vector<64x128xbf16>, vector<128x512xbf16>, vector<64x512xf32> -> vector<64x512xf32>
    %c0_3 = arith.constant 0 : index
    %c0_4 = arith.constant 0 : index
    %3 = vector.load %arg4[%c0_3, %c0_4] : memref<1x512xf32, #tpu.memory_space<vmem>>, vector<1x512xf32>
    %4 = vector.broadcast %3 : vector<1x512xf32> to vector<64x512xf32>
    %5 = arith.addf %2, %4 : vector<64x512xf32>
    %6 = arith.truncf %5 : vector<64x512xf32> to vector<64x512xbf16>
    %c0_5 = arith.constant 0 : index
    %c0_6 = arith.constant 0 : index
    %7 = vector.load %arg5[%c0_5, %c0_6] : memref<64x512xbf16, #tpu.memory_space<vmem>>, vector<64x512xbf16>
    tpu.vector_store %arg5[%c0_5, %c0_6], %6 {strides = array<i32>} : memref<64x512xbf16, #tpu.memory_space<vmem>>, vector<64x512xbf16>,
    return
  }
  func.func @transform_0(%arg0: i32, %arg1: i32) -> (i32, i32) {
    %c0_i32 = arith.constant 0 : i32
    %c0_i32_0 = arith.constant 0 : i32
    return %arg0, %c0_i32 : i32, i32
  }
  func.func @transform_1(%arg0: i32, %arg1: i32) -> (i32, i32) {
    %c0_i32 = arith.constant 0 : i32
    %c0_i32_0 = arith.constant 0 : i32
    return %c0_i32, %arg1 : i32, i32
  }
  func.func @transform_2(%arg0: i32, %arg1: i32) -> (i32, i32) {
    %c0_i32 = arith.constant 0 : i32
    %c0_i32_0 = arith.constant 0 : i32
    return %c0_i32, %arg1 : i32, i32
  }
  func.func @transform_3(%arg0: i32, %arg1: i32) -> (i32, i32) {
    %c0_i32 = arith.constant 0 : i32
    return %arg0, %arg1 : i32, i32
  }
}

module attributes {stable_mosaic.version = 11 : i64} {
  func.func @_lstm_seq_kernel(%arg0: i32, %arg1: memref<8x8x512xbf16, #tpu.memory_space<vmem>>, %arg2: memref<128x512xbf16, #tpu.memory_space<vmem>>, %arg3: memref<8x8x128xbf16, #tpu.memory_space<vmem>>, %arg4: memref<8x128xf32, #tpu.memory_space<vmem>>, %arg5: memref<8x128xf32, #tpu.memory_space<vmem>>) attributes {dimension_semantics = [#tpu.dimension_semantics<parallel>], iteration_bounds = array<i64: 1>, scalar_prefetch = 0 : i64, scratch_operands = 2 : i64, tpu.core_type = #tpu.core_type<tc>, window_params = [{transform_indices = @transform_0, window_bounds = array<i64: 8, 8, 512>}, {pipeline_mode = #tpu.pipeline_mode<synchronous>, transform_indices = @transform_1, window_bounds = array<i64: 128, 512>}, {transform_indices = @transform_2, window_bounds = array<i64: 8, 8, 128>}]} {
    %cst = arith.constant 0.000000e+00 : f32
    %0 = vector.broadcast %cst : f32 to vector<8x128xf32>
    %c0 = arith.constant 0 : index
    %c0_0 = arith.constant 0 : index
    %1 = vector.load %arg4[%c0, %c0_0] : memref<8x128xf32, #tpu.memory_space<vmem>>, vector<8x128xf32>
    tpu.vector_store %arg4[%c0, %c0_0], %0 {strides = array<i32>} : memref<8x128xf32, #tpu.memory_space<vmem>>, vector<8x128xf32>,
    %cst_1 = arith.constant 0.000000e+00 : f32
    %2 = vector.broadcast %cst_1 : f32 to vector<8x128xf32>
    %c0_2 = arith.constant 0 : index
    %c0_3 = arith.constant 0 : index
    %3 = vector.load %arg5[%c0_2, %c0_3] : memref<8x128xf32, #tpu.memory_space<vmem>>, vector<8x128xf32>
    tpu.vector_store %arg5[%c0_2, %c0_3], %2 {strides = array<i32>} : memref<8x128xf32, #tpu.memory_space<vmem>>, vector<8x128xf32>,
    %c0_4 = arith.constant 0 : index
    %c0_5 = arith.constant 0 : index
    %4 = vector.load %arg2[%c0_4, %c0_5] : memref<128x512xbf16, #tpu.memory_space<vmem>>, vector<128x512xbf16>
    %c0_i32 = arith.constant 0 : i32
    %c8_i32 = arith.constant 8 : i32
    %5 = arith.addi %c0_i32, %c8_i32 : i32
    %c1_i32 = arith.constant 1 : i32
    scf.for %arg6 = %c0_i32 to %5 step %c1_i32  : i32 {
      %c0_7 = arith.constant 0 : index
      %c0_8 = arith.constant 0 : index
      %6 = vector.load %arg4[%c0_7, %c0_8] : memref<8x128xf32, #tpu.memory_space<vmem>>, vector<8x128xf32>
      %c0_9 = arith.constant 0 : index
      %c0_10 = arith.constant 0 : index
      %7 = vector.load %arg5[%c0_9, %c0_10] : memref<8x128xf32, #tpu.memory_space<vmem>>, vector<8x128xf32>
      %8 = arith.index_cast %arg6 : i32 to index
      %c0_11 = arith.constant 0 : index
      %c0_12 = arith.constant 0 : index
      %9 = vector.load %arg1[%8, %c0_11, %c0_12] : memref<8x8x512xbf16, #tpu.memory_space<vmem>>, vector<1x8x512xbf16>
      %10 = vector.shape_cast %9 : vector<1x8x512xbf16> to vector<8x512xbf16>
      %11 = arith.extf %10 : vector<8x512xbf16> to vector<8x512xf32>
      %12 = arith.truncf %6 : vector<8x128xf32> to vector<8x128xbf16>
      %cst_13 = arith.constant dense<0.000000e+00> : vector<8x512xf32>
      %13 = tpu.matmul %12, %4, %cst_13 {dimension_numbers = #tpu.dot_dimension_numbers<[1], [0], [0], [1], [0, 0, 1, 1], [], []>} : vector<8x128xbf16>, vector<128x512xbf16>, vector<8x512xf32> -> vector<8x512xf32>
      %14 = arith.addf %11, %13 : vector<8x512xf32>
      %15 = vector.extract_strided_slice %14 {offsets = [0, 0], sizes = [8, 128], strides = [1, 1]} : vector<8x512xf32> to vector<8x128xf32>
      %16 = arith.negf %15 : vector<8x128xf32>
      %17 = math.exp %16 : vector<8x128xf32>
      %cst_14 = arith.constant 1.000000e+00 : f32
      %18 = vector.broadcast %cst_14 : f32 to vector<8x128xf32>
      %19 = arith.addf %18, %17 : vector<8x128xf32>
      %20 = arith.divf %18, %19 : vector<8x128xf32>
      %21 = vector.extract_strided_slice %14 {offsets = [0, 128], sizes = [8, 128], strides = [1, 1]} : vector<8x512xf32> to vector<8x128xf32>
      %22 = arith.negf %21 : vector<8x128xf32>
      %23 = math.exp %22 : vector<8x128xf32>
      %cst_15 = arith.constant 1.000000e+00 : f32
      %24 = vector.broadcast %cst_15 : f32 to vector<8x128xf32>
      %25 = arith.addf %24, %23 : vector<8x128xf32>
      %26 = arith.divf %24, %25 : vector<8x128xf32>
      %27 = vector.extract_strided_slice %14 {offsets = [0, 256], sizes = [8, 128], strides = [1, 1]} : vector<8x512xf32> to vector<8x128xf32>
      %28 = math.tanh %27 : vector<8x128xf32>
      %29 = vector.extract_strided_slice %14 {offsets = [0, 384], sizes = [8, 128], strides = [1, 1]} : vector<8x512xf32> to vector<8x128xf32>
      %30 = arith.negf %29 : vector<8x128xf32>
      %31 = math.exp %30 : vector<8x128xf32>
      %cst_16 = arith.constant 1.000000e+00 : f32
      %32 = vector.broadcast %cst_16 : f32 to vector<8x128xf32>
      %33 = arith.addf %32, %31 : vector<8x128xf32>
      %34 = arith.divf %32, %33 : vector<8x128xf32>
      %35 = arith.mulf %26, %7 : vector<8x128xf32>
      %36 = arith.mulf %20, %28 : vector<8x128xf32>
      %37 = arith.addf %35, %36 : vector<8x128xf32>
      %38 = math.tanh %37 : vector<8x128xf32>
      %39 = arith.mulf %34, %38 : vector<8x128xf32>
      %c0_17 = arith.constant 0 : index
      %c0_18 = arith.constant 0 : index
      %40 = vector.load %arg4[%c0_17, %c0_18] : memref<8x128xf32, #tpu.memory_space<vmem>>, vector<8x128xf32>
      tpu.vector_store %arg4[%c0_17, %c0_18], %39 {strides = array<i32>} : memref<8x128xf32, #tpu.memory_space<vmem>>, vector<8x128xf32>,
      %c0_19 = arith.constant 0 : index
      %c0_20 = arith.constant 0 : index
      %41 = vector.load %arg5[%c0_19, %c0_20] : memref<8x128xf32, #tpu.memory_space<vmem>>, vector<8x128xf32>
      tpu.vector_store %arg5[%c0_19, %c0_20], %37 {strides = array<i32>} : memref<8x128xf32, #tpu.memory_space<vmem>>, vector<8x128xf32>,
      %42 = arith.truncf %39 : vector<8x128xf32> to vector<8x128xbf16>
      %43 = arith.index_cast %arg6 : i32 to index
      %c0_21 = arith.constant 0 : index
      %c0_22 = arith.constant 0 : index
      %44 = vector.load %arg3[%43, %c0_21, %c0_22] : memref<8x8x128xbf16, #tpu.memory_space<vmem>>, vector<1x8x128xbf16>
      %45 = vector.shape_cast %44 : vector<1x8x128xbf16> to vector<8x128xbf16>
      %46 = vector.shape_cast %42 : vector<8x128xbf16> to vector<1x8x128xbf16>
      tpu.vector_store %arg3[%43, %c0_21, %c0_22], %46 {strides = array<i32>} : memref<8x8x128xbf16, #tpu.memory_space<vmem>>, vector<1x8x128xbf16>,
    }
    %c8_i32_6 = arith.constant 8 : i32
    return
  }
  func.func @transform_0(%arg0: i32) -> (i32, i32, i32) {
    %c0_i32 = arith.constant 0 : i32
    %c0_i32_0 = arith.constant 0 : i32
    %c0_i32_1 = arith.constant 0 : i32
    return %c0_i32, %arg0, %c0_i32_0 : i32, i32, i32
  }
  func.func @transform_1(%arg0: i32) -> (i32, i32) {
    %c0_i32 = arith.constant 0 : i32
    %c0_i32_0 = arith.constant 0 : i32
    %c0_i32_1 = arith.constant 0 : i32
    return %c0_i32, %c0_i32_0 : i32, i32
  }
  func.func @transform_2(%arg0: i32) -> (i32, i32, i32) {
    %c0_i32 = arith.constant 0 : i32
    %c0_i32_0 = arith.constant 0 : i32
    %c0_i32_1 = arith.constant 0 : i32
    return %c0_i32, %arg0, %c0_i32_0 : i32, i32, i32
  }
}

</mosaic_0001>

<llo_original>
// kernel: decoder_rnn_forward.5
$region0: #{decoder_rnn_forward.5}
  #allocation0 [shape = 'u32[]', space=smem, size = 0x4, offset = 0x4, fixed_abs, tag = 'smem constant byte address 0x4 - core index']
  #allocation1 [shape = 'u32[144,128]{1,0:T(1,128)}', space=vmem, size = 0x12000, scoped, tag = 'internal scratch']
  %s0 = inlined_call_operand.vmem [shape: bf16[64,128], index: 0, kind: input, shape index: {}]
  %s1 = inlined_call_operand.vmem [shape: bf16[128,128], index: 1, kind: input, shape index: {}]
  %s2 = inlined_call_operand.vmem [shape: f32[1,128], index: 2, kind: input, shape index: {}]
  %s3 = inlined_call_operand.vmem [shape: f32[64,128], index: 3, kind: output, shape index: {}]
  %s4 = sld [smem:[#allocation0]]
  $region22: #{decoder_rnn_forward.5} parent=0
    _
  %s6 = ssub.s32 1, %s4
  %s7 = scalar_select 0, %s6, %s4
  // Predicated region
  $region2: #{decoder_rnn_forward.5} parent=0 // pred_check
    _
  $region3: #{decoder_rnn_forward.5} parent=0 // pred_check_branch
    %9 = sbr.rel (0) target = $region5
  $region4: #{decoder_rnn_forward.5} parent=0 // pred_region
    _
  $region5: #{decoder_rnn_forward.5} parent=0 // pred_fallthru
    _
  // Predicated region
  $region6: #{decoder_rnn_forward.5} parent=0 // pred_check
    _
  $region7: #{decoder_rnn_forward.5} parent=0 // pred_check_branch
    %11 = sbr.rel (0) target = $region9
  $region8: #{decoder_rnn_forward.5} parent=0 // pred_region
    _
  $region9: #{decoder_rnn_forward.5} parent=0 // pred_fallthru
    _
  // Predicated region
  $region10: #{decoder_rnn_forward.5} parent=0 // pred_check
    _
  $region11: #{decoder_rnn_forward.5} parent=0 // pred_check_branch
    %13 = sbr.rel (0) target = $region13
  $region12: #{decoder_rnn_forward.5} parent=0 // pred_region
    _
  $region13: #{decoder_rnn_forward.5} parent=0 // pred_fallthru
    _
  %v15 = vld [vmem:[%s0] sm:$0xf]
  %v16 = vld [vmem:[%s0 + $0x4] sm:$0xf]
  %v17 = vld [vmem:[%s0 + $0x8] sm:$0xf]
  %v18 = vld [vmem:[%s0 + $0xc] sm:$0xf]
  %v19 = vld [vmem:[%s0 + $0x10] sm:$0xf]
  %v20 = vld [vmem:[%s0 + $0x14] sm:$0xf]
  %v21 = vld [vmem:[%s0 + $0x18] sm:$0xf]
  %v22 = vld [vmem:[%s0 + $0x1c] sm:$0xf]
  %v23 = vld [vmem:[%s1] sm:$0xf]
  %v24 = vld [vmem:[%s1 + $0x4] sm:$0xf]
  %v25 = vld [vmem:[%s1 + $0x8] sm:$0xf]
  %v26 = vld [vmem:[%s1 + $0xc] sm:$0xf]
  %v27 = vld [vmem:[%s1 + $0x10] sm:$0xf]
  %v28 = vld [vmem:[%s1 + $0x14] sm:$0xf]
  %v29 = vld [vmem:[%s1 + $0x18] sm:$0xf]
  %v30 = vld [vmem:[%s1 + $0x1c] sm:$0xf]
  %v31 = vld [vmem:[%s1 + $0x20] sm:$0xf]
  %v32 = vld [vmem:[%s1 + $0x24] sm:$0xf]
  %v33 = vld [vmem:[%s1 + $0x28] sm:$0xf]
  %v34 = vld [vmem:[%s1 + $0x2c] sm:$0xf]
  %v35 = vld [vmem:[%s1 + $0x30] sm:$0xf]
  %v36 = vld [vmem:[%s1 + $0x34] sm:$0xf]
  %v37 = vld [vmem:[%s1 + $0x38] sm:$0xf]
  %v38 = vld [vmem:[%s1 + $0x3c] sm:$0xf]
  %v39 = vld [vmem:[%s2] sm:$0x1]
  %v41 = vlaneseq
  %v42 = vshrl.u32 %v41, 7
  %v43 = vsub.s32 0, %v42
  %v44 = vrot.slane %v39, %v43
  %v54 = vunpack.c.l.b16 %v15
  %v55 = vunpack.c.l.b16 %v16
  %v56 = vunpack.c.l.b16 %v17
  %v57 = vunpack.c.l.b16 %v18
  %v58 = vunpack.c.l.b16 %v19
  %v59 = vunpack.c.l.b16 %v20
  %v60 = vunpack.c.l.b16 %v21
  %v61 = vunpack.c.l.b16 %v22
  %v62 = vpack.c.b16 %v55, %v54
  %v63 = vpack.c.b16 %v57, %v56
  %v64 = vpack.c.b16 %v59, %v58
  %v65 = vpack.c.b16 %v61, %v60
  %v86 = vunpack.c.l.b16 %v23
  %v87 = vunpack.c.l.b16 %v24
  %v88 = vunpack.c.l.b16 %v25
  %v89 = vunpack.c.l.b16 %v26
  %v90 = vunpack.c.l.b16 %v27
  %v91 = vunpack.c.l.b16 %v28
  %v92 = vunpack.c.l.b16 %v29
  %v93 = vunpack.c.l.b16 %v30
  %v94 = vunpack.c.l.b16 %v31
  %v95 = vunpack.c.l.b16 %v32
  %v96 = vunpack.c.l.b16 %v33
  %v97 = vunpack.c.l.b16 %v34
  %v98 = vunpack.c.l.b16 %v35
  %v99 = vunpack.c.l.b16 %v36
  %v100 = vunpack.c.l.b16 %v37
  %v101 = vunpack.c.l.b16 %v38
  %v102 = vpack.c.b16 %v87, %v86
  %v103 = vpack.c.b16 %v89, %v88
  %v104 = vpack.c.b16 %v91, %v90
  %v105 = vpack.c.b16 %v93, %v92
  %v106 = vpack.c.b16 %v95, %v94
  %v107 = vpack.c.b16 %v97, %v96
  %v108 = vpack.c.b16 %v99, %v98
  %v109 = vpack.c.b16 %v101, %v100
  %118 = vmatprep.subr.bf16.mxu0 0
  %119 = vmatpush1.bf16.msra.mxu0 %v102
  %120 = vmatprep.subr.bf16.mxu0 0
  %121 = vmatpush1.bf16.msra.mxu0 %v103
  %122 = vmatprep.subr.bf16.mxu0 0
  %123 = vmatpush1.bf16.msra.mxu0 %v104
  %124 = vmatprep.subr.bf16.mxu0 0
  %125 = vmatpush1.bf16.msra.mxu0 %v105
  %126 = vmatprep.subr.bf16.mxu0 0
  %127 = vmatpush1.bf16.msra.mxu0 %v106
  %128 = vmatprep.subr.bf16.mxu0 0
  %129 = vmatpush1.bf16.msra.mxu0 %v107
  %130 = vmatprep.subr.bf16.mxu0 0
  %131 = vmatpush1.bf16.msra.mxu0 %v108
  %132 = vmatprep.subr.bf16.mxu0 0
  %133 = vmatpush1.bf16.msra.mxu0 %v109
  %134 = vmatprep.subr.bf16.mxu0 0
  %135 = vmatpush1.bf16.msra.mxu0 0
  %136 = vmatprep.subr.bf16.mxu0 0
  %137 = vmatpush1.bf16.msra.mxu0 0
  %138 = vmatprep.subr.bf16.mxu0 0
  %139 = vmatpush1.bf16.msra.mxu0 0
  %140 = vmatprep.subr.bf16.mxu0 0
  %141 = vmatpush1.bf16.msra.mxu0 0
  %142 = vmatprep.subr.bf16.mxu0 0
  %143 = vmatpush1.bf16.msra.mxu0 0
  %144 = vmatprep.subr.bf16.mxu0 0
  %145 = vmatpush1.bf16.msra.mxu0 0
  %146 = vmatprep.subr.bf16.mxu0 0
  %147 = vmatpush1.bf16.msra.mxu0 0
  %148 = vmatprep.subr.bf16.mxu0 0
  %149 = vmatpush1.bf16.msra.mxu0 0
  %150 = vmatprep.mubr.bf16.mxu0 0
  %151 = vmatmul.mubr.bf16.gmra.mrb[0].mxu0 %v62
  %v152 = vpop.f32.mrb[0].mxu0
  %v153 = vadd.f32 %v44, %v152
  %v154 = vpop.f32.mrb[0].mxu0
  %v155 = vpop.f32.mrb[0].mxu0
  %v156 = vadd.f32 %v44, %v155
  %v157 = vpop.f32.mrb[0].mxu0
  %158 = vmatprep.mubr.bf16.mxu0 0
  %159 = vmatmul.mubr.bf16.gmra.mrb[0].mxu0 %v63
  %v160 = vpop.f32.mrb[0].mxu0
  %v161 = vadd.f32 %v44, %v160
  %v162 = vpop.f32.mrb[0].mxu0
  %v163 = vpop.f32.mrb[0].mxu0
  %v164 = vadd.f32 %v44, %v163
  %v165 = vpop.f32.mrb[0].mxu0
  %166 = vmatprep.mubr.bf16.mxu0 0
  %167 = vmatmul.mubr.bf16.gmra.mrb[0].mxu0 %v64
  %v168 = vpop.f32.mrb[0].mxu0
  %v169 = vadd.f32 %v44, %v168
  %v170 = vpop.f32.mrb[0].mxu0
  %v171 = vpop.f32.mrb[0].mxu0
  %v172 = vadd.f32 %v44, %v171
  %v173 = vpop.f32.mrb[0].mxu0
  %174 = vmatprep.mubr.bf16.mxu0 0
  %175 = vmatmul.mubr.bf16.gmra.mrb[0].mxu0 %v65
  %v176 = vpop.f32.mrb[0].mxu0
  %v177 = vadd.f32 %v44, %v176
  %v178 = vpop.f32.mrb[0].mxu0
  %v179 = vpop.f32.mrb[0].mxu0
  %v180 = vadd.f32 %v44, %v179
  %v181 = vpop.f32.mrb[0].mxu0
  %182 = vdwg.mxu0
  %183 = vst [vmem:[%s3] sm:$0xff] %v153
  %184 = vst [vmem:[%s3 + $0x8] sm:$0xff] %v156
  %185 = vst [vmem:[%s3 + $0x10] sm:$0xff] %v161
  %186 = vst [vmem:[%s3 + $0x18] sm:$0xff] %v164
  %187 = vst [vmem:[%s3 + $0x20] sm:$0xff] %v169
  %188 = vst [vmem:[%s3 + $0x28] sm:$0xff] %v172
  %189 = vst [vmem:[%s3 + $0x30] sm:$0xff] %v177
  %190 = vst [vmem:[%s3 + $0x38] sm:$0xff] %v180
  // Predicated region
  $region14: #{decoder_rnn_forward.5} parent=0 // pred_check
    _
  $region15: #{decoder_rnn_forward.5} parent=0 // pred_check_branch
    %192 = sbr.rel (0) target = $region17
  $region16: #{decoder_rnn_forward.5} parent=0 // pred_region
    _
  $region17: #{decoder_rnn_forward.5} parent=0 // pred_fallthru
    _
  // Predicated region
  $region18: #{decoder_rnn_forward.5} parent=0 // pred_check
    _
  $region19: #{decoder_rnn_forward.5} parent=0 // pred_check_branch
    %194 = sbr.rel (0) target = $region21
  $region20: #{decoder_rnn_forward.5} parent=0 // pred_region
    _
  $region21: #{decoder_rnn_forward.5} parent=0 // pred_fallthru
    _

// kernel: decoder_rnn_forward.3
$region0: #{decoder_rnn_forward.3}
  #allocation0 [shape = 'u32[]', space=smem, size = 0x4, offset = 0x4, fixed_abs, tag = 'smem constant byte address 0x4 - core index']
  #allocation1 [shape = 'u32[144,128]{1,0:T(1,128)}', space=vmem, size = 0x12000, scoped, tag = 'internal scratch']
  %s0 = inlined_call_operand.vmem [shape: bf16[64,128], index: 0, kind: input, shape index: {}]
  %s1 = inlined_call_operand.vmem [shape: bf16[128,512], index: 1, kind: input, shape index: {}]
  %s2 = inlined_call_operand.vmem [shape: f32[1,512], index: 2, kind: input, shape index: {}]
  %s3 = inlined_call_operand.vmem [shape: bf16[64,512], index: 3, kind: output, shape index: {}]
  %s4 = sld [smem:[#allocation0]]
  $region22: #{decoder_rnn_forward.3} parent=0
    _
  %s6 = ssub.s32 1, %s4
  %s7 = scalar_select 0, %s6, %s4
  // Predicated region
  $region2: #{decoder_rnn_forward.3} parent=0 // pred_check
    _
  $region3: #{decoder_rnn_forward.3} parent=0 // pred_check_branch
    %9 = sbr.rel (0) target = $region5
  $region4: #{decoder_rnn_forward.3} parent=0 // pred_region
    _
  $region5: #{decoder_rnn_forward.3} parent=0 // pred_fallthru
    _
  // Predicated region
  $region6: #{decoder_rnn_forward.3} parent=0 // pred_check
    _
  $region7: #{decoder_rnn_forward.3} parent=0 // pred_check_branch
    %11 = sbr.rel (0) target = $region9
  $region8: #{decoder_rnn_forward.3} parent=0 // pred_region
    _
  $region9: #{decoder_rnn_forward.3} parent=0 // pred_fallthru
    _
  // Predicated region
  $region10: #{decoder_rnn_forward.3} parent=0 // pred_check
    _
  $region11: #{decoder_rnn_forward.3} parent=0 // pred_check_branch
    %13 = sbr.rel (0) target = $region13
  $region12: #{decoder_rnn_forward.3} parent=0 // pred_region
    _
  $region13: #{decoder_rnn_forward.3} parent=0 // pred_fallthru
    _
  %v15 = vld [vmem:[%s0] sm:$0xf]
  %v16 = vld [vmem:[%s0 + $0x4] sm:$0xf]
  %v17 = vld [vmem:[%s0 + $0x8] sm:$0xf]
  %v18 = vld [vmem:[%s0 + $0xc] sm:$0xf]
  %v19 = vld [vmem:[%s0 + $0x10] sm:$0xf]
  %v20 = vld [vmem:[%s0 + $0x14] sm:$0xf]
  %v21 = vld [vmem:[%s0 + $0x18] sm:$0xf]
  %v22 = vld [vmem:[%s0 + $0x1c] sm:$0xf]
  %v23 = vld [vmem:[%s1] sm:$0xff]
  %v24 = vld [vmem:[%s1 + $0x8] sm:$0xff]
  %v25 = vld [vmem:[%s1 + $0x10] sm:$0xff]
  %v26 = vld [vmem:[%s1 + $0x18] sm:$0xff]
  %v27 = vld [vmem:[%s1 + $0x20] sm:$0xff]
  %v28 = vld [vmem:[%s1 + $0x28] sm:$0xff]
  %v29 = vld [vmem:[%s1 + $0x30] sm:$0xff]
  %v30 = vld [vmem:[%s1 + $0x38] sm:$0xff]
  %v31 = vld [vmem:[%s1 + $0x40] sm:$0xff]
  %v32 = vld [vmem:[%s1 + $0x48] sm:$0xff]
  %v33 = vld [vmem:[%s1 + $0x50] sm:$0xff]
  %v34 = vld [vmem:[%s1 + $0x58] sm:$0xff]
  %v35 = vld [vmem:[%s1 + $0x60] sm:$0xff]
  %v36 = vld [vmem:[%s1 + $0x68] sm:$0xff]
  %v37 = vld [vmem:[%s1 + $0x70] sm:$0xff]
  %v38 = vld [vmem:[%s1 + $0x78] sm:$0xff]
  %v39 = vld [vmem:[%s1 + $0x80] sm:$0xff]
  %v40 = vld [vmem:[%s1 + $0x88] sm:$0xff]
  %v41 = vld [vmem:[%s1 + $0x90] sm:$0xff]
  %v42 = vld [vmem:[%s1 + $0x98] sm:$0xff]
  %v43 = vld [vmem:[%s1 + $0xa0] sm:$0xff]
  %v44 = vld [vmem:[%s1 + $0xa8] sm:$0xff]
  %v45 = vld [vmem:[%s1 + $0xb0] sm:$0xff]
  %v46 = vld [vmem:[%s1 + $0xb8] sm:$0xff]
  %v47 = vld [vmem:[%s1 + $0xc0] sm:$0xff]
  %v48 = vld [vmem:[%s1 + $0xc8] sm:$0xff]
  %v49 = vld [vmem:[%s1 + $0xd0] sm:$0xff]
  %v50 = vld [vmem:[%s1 + $0xd8] sm:$0xff]
  %v51 = vld [vmem:[%s1 + $0xe0] sm:$0xff]
  %v52 = vld [vmem:[%s1 + $0xe8] sm:$0xff]
  %v53 = vld [vmem:[%s1 + $0xf0] sm:$0xff]
  %v54 = vld [vmem:[%s1 + $0xf8] sm:$0xff]
  %v55 = vld [vmem:[%s2] sm:$0xf]
  %v57 = vlaneseq
  %v58 = vshrl.u32 %v57, 7
  %v59 = vsub.s32 0, %v58
  %v60 = vrot.slane %v55, %v59
  %v61 = vlaneseq
  %v62 = vshrl.u32 %v61, 7
  %v63 = vsub.s32 1, %v62
  %v64 = vrot.slane %v55, %v63
  %v65 = vlaneseq
  %v66 = vshrl.u32 %v65, 7
  %v67 = vsub.s32 2, %v66
  %v68 = vrot.slane %v55, %v67
  %v69 = vlaneseq
  %v70 = vshrl.u32 %v69, 7
  %v71 = vsub.s32 3, %v70
  %v72 = vrot.slane %v55, %v71
  %v85 = vunpack.c.l.b16 %v15
  %v86 = vunpack.c.l.b16 %v16
  %v87 = vunpack.c.l.b16 %v17
  %v88 = vunpack.c.l.b16 %v18
  %v89 = vunpack.c.l.b16 %v19
  %v90 = vunpack.c.l.b16 %v20
  %v91 = vunpack.c.l.b16 %v21
  %v92 = vunpack.c.l.b16 %v22
  %v93 = vpack.c.b16 %v86, %v85
  %v94 = vpack.c.b16 %v88, %v87
  %v95 = vpack.c.b16 %v90, %v89
  %v96 = vpack.c.b16 %v92, %v91
  %v133 = vunpack.c.l.b16 %v23
  %v134 = vunpack.c.h.b16 %v23
  %v135 = vunpack.c.l.b16 %v24
  %v136 = vunpack.c.h.b16 %v24
  %v137 = vunpack.c.l.b16 %v25
  %v138 = vunpack.c.h.b16 %v25
  %v139 = vunpack.c.l.b16 %v26
  %v140 = vunpack.c.h.b16 %v26
  %v141 = vunpack.c.l.b16 %v27
  %v142 = vunpack.c.h.b16 %v27
  %v143 = vunpack.c.l.b16 %v28
  %v144 = vunpack.c.h.b16 %v28
  %v145 = vunpack.c.l.b16 %v29
  %v146 = vunpack.c.h.b16 %v29
  %v147 = vunpack.c.l.b16 %v30
  %v148 = vunpack.c.h.b16 %v30
  %v149 = vunpack.c.l.b16 %v31
  %v150 = vunpack.c.h.b16 %v31
  %v151 = vunpack.c.l.b16 %v32
  %v152 = vunpack.c.h.b16 %v32
  %v153 = vunpack.c.l.b16 %v33
  %v154 = vunpack.c.h.b16 %v33
  %v155 = vunpack.c.l.b16 %v34
  %v156 = vunpack.c.h.b16 %v34
  %v157 = vunpack.c.l.b16 %v35
  %v158 = vunpack.c.h.b16 %v35
  %v159 = vunpack.c.l.b16 %v36
  %v160 = vunpack.c.h.b16 %v36
  %v161 = vunpack.c.l.b16 %v37
  %v162 = vunpack.c.h.b16 %v37
  %v163 = vunpack.c.l.b16 %v38
  %v164 = vunpack.c.h.b16 %v38
  %v165 = vunpack.c.l.b16 %v39
  %v166 = vunpack.c.h.b16 %v39
  %v167 = vunpack.c.l.b16 %v40
  %v168 = vunpack.c.h.b16 %v40
  %v169 = vunpack.c.l.b16 %v41
  %v170 = vunpack.c.h.b16 %v41
  %v171 = vunpack.c.l.b16 %v42
  %v172 = vunpack.c.h.b16 %v42
  %v173 = vunpack.c.l.b16 %v43
  %v174 = vunpack.c.h.b16 %v43
  %v175 = vunpack.c.l.b16 %v44
  %v176 = vunpack.c.h.b16 %v44
  %v177 = vunpack.c.l.b16 %v45
  %v178 = vunpack.c.h.b16 %v45
  %v179 = vunpack.c.l.b16 %v46
  %v180 = vunpack.c.h.b16 %v46
  %v181 = vunpack.c.l.b16 %v47
  %v182 = vunpack.c.h.b16 %v47
  %v183 = vunpack.c.l.b16 %v48
  %v184 = vunpack.c.h.b16 %v48
  %v185 = vunpack.c.l.b16 %v49
  %v186 = vunpack.c.h.b16 %v49
  %v187 = vunpack.c.l.b16 %v50
  %v188 = vunpack.c.h.b16 %v50
  %v189 = vunpack.c.l.b16 %v51
  %v190 = vunpack.c.h.b16 %v51
  %v191 = vunpack.c.l.b16 %v52
  %v192 = vunpack.c.h.b16 %v52
  %v193 = vunpack.c.l.b16 %v53
  %v194 = vunpack.c.h.b16 %v53
  %v195 = vunpack.c.l.b16 %v54
  %v196 = vunpack.c.h.b16 %v54
  %v197 = vpack.c.b16 %v137, %v133
  %v198 = vpack.c.b16 %v138, %v134
  %v199 = vpack.c.b16 %v139, %v135
  %v200 = vpack.c.b16 %v140, %v136
  %v201 = vpack.c.b16 %v145, %v141
  %v202 = vpack.c.b16 %v146, %v142
  %v203 = vpack.c.b16 %v147, %v143
  %v204 = vpack.c.b16 %v148, %v144
  %v205 = vpack.c.b16 %v153, %v149
  %v206 = vpack.c.b16 %v154, %v150
  %v207 = vpack.c.b16 %v155, %v151
  %v208 = vpack.c.b16 %v156, %v152
  %v209 = vpack.c.b16 %v161, %v157
  %v210 = vpack.c.b16 %v162, %v158
  %v211 = vpack.c.b16 %v163, %v159
  %v212 = vpack.c.b16 %v164, %v160
  %v213 = vpack.c.b16 %v169, %v165
  %v214 = vpack.c.b16 %v170, %v166
  %v215 = vpack.c.b16 %v171, %v167
  %v216 = vpack.c.b16 %v172, %v168
  %v217 = vpack.c.b16 %v177, %v173
  %v218 = vpack.c.b16 %v178, %v174
  %v219 = vpack.c.b16 %v179, %v175
  %v220 = vpack.c.b16 %v180, %v176
  %v221 = vpack.c.b16 %v185, %v181
  %v222 = vpack.c.b16 %v186, %v182
  %v223 = vpack.c.b16 %v187, %v183
  %v224 = vpack.c.b16 %v188, %v184
  %v225 = vpack.c.b16 %v193, %v189
  %v226 = vpack.c.b16 %v194, %v190
  %v227 = vpack.c.b16 %v195, %v191
  %v228 = vpack.c.b16 %v196, %v192
  %261 = vmatprep.subr.bf16.mxu0 %v198
  %262 = vmatpush1.bf16.msra.mxu0 %v197
  %263 = vmatprep.subr.bf16.mxu0 %v202
  %264 = vmatpush1.bf16.msra.mxu0 %v201
  %265 = vmatprep.subr.bf16.mxu0 %v206
  %266 = vmatpush1.bf16.msra.mxu0 %v205
  %267 = vmatprep.subr.bf16.mxu0 %v210
  %268 = vmatpush1.bf16.msra.mxu0 %v209
  %269 = vmatprep.subr.bf16.mxu0 %v214
  %270 = vmatpush1.bf16.msra.mxu0 %v213
  %271 = vmatprep.subr.bf16.mxu0 %v218
  %272 = vmatpush1.bf16.msra.mxu0 %v217
  %273 = vmatprep.subr.bf16.mxu0 %v222
  %274 = vmatpush1.bf16.msra.mxu0 %v221
  %275 = vmatprep.subr.bf16.mxu0 %v226
  %276 = vmatpush1.bf16.msra.mxu0 %v225
  %277 = vmatprep.subr.bf16.mxu0 0
  %278 = vmatpush1.bf16.msra.mxu0 0
  %279 = vmatprep.subr.bf16.mxu0 0
  %280 = vmatpush1.bf16.msra.mxu0 0
  %281 = vmatprep.subr.bf16.mxu0 0
  %282 = vmatpush1.bf16.msra.mxu0 0
  %283 = vmatprep.subr.bf16.mxu0 0
  %284 = vmatpush1.bf16.msra.mxu0 0
  %285 = vmatprep.subr.bf16.mxu0 0
  %286 = vmatpush1.bf16.msra.mxu0 0
  %287 = vmatprep.subr.bf16.mxu0 0
  %288 = vmatpush1.bf16.msra.mxu0 0
  %289 = vmatprep.subr.bf16.mxu0 0
  %290 = vmatpush1.bf16.msra.mxu0 0
  %291 = vmatprep.subr.bf16.mxu0 0
  %292 = vmatpush1.bf16.msra.mxu0 0
  %293 = vmatprep.mubr.bf16.mxu0 0
  %294 = vmatmul.mubr.bf16.gmra.mrb[0].mxu0 %v93
  %v295 = vpop.f32.mrb[0].mxu0
  %v296 = vadd.f32 %v60, %v295
  %v297 = vpop.f32.mrb[0].mxu0
  %v298 = vadd.f32 %v64, %v297
  %v299 = vpop.f32.mrb[0].mxu0
  %v300 = vadd.f32 %v60, %v299
  %v301 = vpop.f32.mrb[0].mxu0
  %v302 = vadd.f32 %v64, %v301
  %303 = vmatprep.mubr.bf16.mxu0 0
  %304 = vmatmul.mubr.bf16.gmra.mrb[0].mxu0 %v94
  %v305 = vpop.f32.mrb[0].mxu0
  %v306 = vadd.f32 %v60, %v305
  %v307 = vpop.f32.mrb[0].mxu0
  %v308 = vadd.f32 %v64, %v307
  %v309 = vpop.f32.mrb[0].mxu0
  %v310 = vadd.f32 %v60, %v309
  %v311 = vpop.f32.mrb[0].mxu0
  %v312 = vadd.f32 %v64, %v311
  %313 = vmatprep.mubr.bf16.mxu0 0
  %314 = vmatmul.mubr.bf16.gmra.mrb[0].mxu0 %v95
  %v315 = vpop.f32.mrb[0].mxu0
  %v316 = vadd.f32 %v60, %v315
  %v317 = vpop.f32.mrb[0].mxu0
  %v318 = vadd.f32 %v64, %v317
  %v319 = vpop.f32.mrb[0].mxu0
  %v320 = vadd.f32 %v60, %v319
  %v321 = vpop.f32.mrb[0].mxu0
  %v322 = vadd.f32 %v64, %v321
  %323 = vmatprep.mubr.bf16.mxu0 0
  %324 = vmatmul.mubr.bf16.gmra.mrb[0].mxu0 %v96
  %v325 = vpop.f32.mrb[0].mxu0
  %v326 = vadd.f32 %v60, %v325
  %v327 = vpop.f32.mrb[0].mxu0
  %v328 = vadd.f32 %v64, %v327
  %v329 = vpop.f32.mrb[0].mxu0
  %v330 = vadd.f32 %v60, %v329
  %v331 = vpop.f32.mrb[0].mxu0
  %v332 = vadd.f32 %v64, %v331
  %333 = vdwg.mxu0
  %334 = vmatprep.subr.bf16.mxu0 %v200
  %335 = vmatpush1.bf16.msra.mxu0 %v199
  %336 = vmatprep.subr.bf16.mxu0 %v204
  %337 = vmatpush1.bf16.msra.mxu0 %v203
  %338 = vmatprep.subr.bf16.mxu0 %v208
  %339 = vmatpush1.bf16.msra.mxu0 %v207
  %340 = vmatprep.subr.bf16.mxu0 %v212
  %341 = vmatpush1.bf16.msra.mxu0 %v211
  %342 = vmatprep.subr.bf16.mxu0 %v216
  %343 = vmatpush1.bf16.msra.mxu0 %v215
  %344 = vmatprep.subr.bf16.mxu0 %v220
  %345 = vmatpush1.bf16.msra.mxu0 %v219
  %346 = vmatprep.subr.bf16.mxu0 %v224
  %347 = vmatpush1.bf16.msra.mxu0 %v223
  %348 = vmatprep.subr.bf16.mxu0 %v228
  %349 = vmatpush1.bf16.msra.mxu0 %v227
  %350 = vmatprep.subr.bf16.mxu0 0
  %351 = vmatpush1.bf16.msra.mxu0 0
  %352 = vmatprep.subr.bf16.mxu0 0
  %353 = vmatpush1.bf16.msra.mxu0 0
  %354 = vmatprep.subr.bf16.mxu0 0
  %355 = vmatpush1.bf16.msra.mxu0 0
  %356 = vmatprep.subr.bf16.mxu0 0
  %357 = vmatpush1.bf16.msra.mxu0 0
  %358 = vmatprep.subr.bf16.mxu0 0
  %359 = vmatpush1.bf16.msra.mxu0 0
  %360 = vmatprep.subr.bf16.mxu0 0
  %361 = vmatpush1.bf16.msra.mxu0 0
  %362 = vmatprep.subr.bf16.mxu0 0
  %363 = vmatpush1.bf16.msra.mxu0 0
  %364 = vmatprep.subr.bf16.mxu0 0
  %365 = vmatpush1.bf16.msra.mxu0 0
  %366 = vmatprep.mubr.bf16.mxu0 0
  %367 = vmatmul.mubr.bf16.gmra.mrb[0].mxu0 %v93
  %v368 = vpop.f32.mrb[0].mxu0
  %v369 = vadd.f32 %v68, %v368
  %v370 = vpop.f32.mrb[0].mxu0
  %v371 = vadd.f32 %v72, %v370
  %v372 = vpop.f32.mrb[0].mxu0
  %v373 = vadd.f32 %v68, %v372
  %v374 = vpop.f32.mrb[0].mxu0
  %v375 = vadd.f32 %v72, %v374
  %376 = vmatprep.mubr.bf16.mxu0 0
  %377 = vmatmul.mubr.bf16.gmra.mrb[0].mxu0 %v94
  %v378 = vpop.f32.mrb[0].mxu0
  %v379 = vadd.f32 %v68, %v378
  %v380 = vpop.f32.mrb[0].mxu0
  %v381 = vadd.f32 %v72, %v380
  %v382 = vpop.f32.mrb[0].mxu0
  %v383 = vadd.f32 %v68, %v382
  %v384 = vpop.f32.mrb[0].mxu0
  %v385 = vadd.f32 %v72, %v384
  %386 = vmatprep.mubr.bf16.mxu0 0
  %387 = vmatmul.mubr.bf16.gmra.mrb[0].mxu0 %v95
  %v388 = vpop.f32.mrb[0].mxu0
  %v389 = vadd.f32 %v68, %v388
  %v390 = vpop.f32.mrb[0].mxu0
  %v391 = vadd.f32 %v72, %v390
  %v392 = vpop.f32.mrb[0].mxu0
  %v393 = vadd.f32 %v68, %v392
  %v394 = vpop.f32.mrb[0].mxu0
  %v395 = vadd.f32 %v72, %v394
  %396 = vmatprep.mubr.bf16.mxu0 0
  %397 = vmatmul.mubr.bf16.gmra.mrb[0].mxu0 %v96
  %v398 = vpop.f32.mrb[0].mxu0
  %v399 = vadd.f32 %v68, %v398
  %v400 = vpop.f32.mrb[0].mxu0
  %v401 = vadd.f32 %v72, %v400
  %v402 = vpop.f32.mrb[0].mxu0
  %v403 = vadd.f32 %v68, %v402
  %v404 = vpop.f32.mrb[0].mxu0
  %v405 = vadd.f32 %v72, %v404
  %406 = vdwg.mxu0
  %v407 = vpack.c.bf16 %v300, %v296
  %v408 = vpack.c.bf16 %v302, %v298
  %v409 = vpack.c.bf16 %v373, %v369
  %v410 = vpack.c.bf16 %v375, %v371
  %v411 = vpack.c.bf16 %v310, %v306
  %v412 = vpack.c.bf16 %v312, %v308
  %v413 = vpack.c.bf16 %v383, %v379
  %v414 = vpack.c.bf16 %v385, %v381
  %v415 = vpack.c.bf16 %v320, %v316
  %v416 = vpack.c.bf16 %v322, %v318
  %v417 = vpack.c.bf16 %v393, %v389
  %v418 = vpack.c.bf16 %v395, %v391
  %v419 = vpack.c.bf16 %v330, %v326
  %v420 = vpack.c.bf16 %v332, %v328
  %v421 = vpack.c.bf16 %v403, %v399
  %v422 = vpack.c.bf16 %v405, %v401
  %v439 = vunpack.c.l.b16 %v407
  %v440 = vunpack.c.l.b16 %v408
  %v441 = vunpack.c.l.b16 %v409
  %v442 = vunpack.c.l.b16 %v410
  %v443 = vunpack.c.h.b16 %v407
  %v444 = vunpack.c.h.b16 %v408
  %v445 = vunpack.c.h.b16 %v409
  %v446 = vunpack.c.h.b16 %v410
  %v447 = vunpack.c.l.b16 %v411
  %v448 = vunpack.c.l.b16 %v412
  %v449 = vunpack.c.l.b16 %v413
  %v450 = vunpack.c.l.b16 %v414
  %v451 = vunpack.c.h.b16 %v411
  %v452 = vunpack.c.h.b16 %v412
  %v453 = vunpack.c.h.b16 %v413
  %v454 = vunpack.c.h.b16 %v414
  %v455 = vunpack.c.l.b16 %v415
  %v456 = vunpack.c.l.b16 %v416
  %v457 = vunpack.c.l.b16 %v417
  %v458 = vunpack.c.l.b16 %v418
  %v459 = vunpack.c.h.b16 %v415
  %v460 = vunpack.c.h.b16 %v416
  %v461 = vunpack.c.h.b16 %v417
  %v462 = vunpack.c.h.b16 %v418
  %v463 = vunpack.c.l.b16 %v419
  %v464 = vunpack.c.l.b16 %v420
  %v465 = vunpack.c.l.b16 %v421
  %v466 = vunpack.c.l.b16 %v422
  %v467 = vunpack.c.h.b16 %v419
  %v468 = vunpack.c.h.b16 %v420
  %v469 = vunpack.c.h.b16 %v421
  %v470 = vunpack.c.h.b16 %v422
  %v471 = vpack.c.b16 %v440, %v439
  %v472 = vpack.c.b16 %v442, %v441
  %v473 = vpack.c.b16 %v444, %v443
  %v474 = vpack.c.b16 %v446, %v445
  %v475 = vpack.c.b16 %v448, %v447
  %v476 = vpack.c.b16 %v450, %v449
  %v477 = vpack.c.b16 %v452, %v451
  %v478 = vpack.c.b16 %v454, %v453
  %v479 = vpack.c.b16 %v456, %v455
  %v480 = vpack.c.b16 %v458, %v457
  %v481 = vpack.c.b16 %v460, %v459
  %v482 = vpack.c.b16 %v462, %v461
  %v483 = vpack.c.b16 %v464, %v463
  %v484 = vpack.c.b16 %v466, %v465
  %v485 = vpack.c.b16 %v468, %v467
  %v486 = vpack.c.b16 %v470, %v469
  %503 = vst [vmem:[%s3] sm:$0xff] %v471
  %504 = vst [vmem:[%s3 + $0x8] sm:$0xff] %v472
  %505 = vst [vmem:[%s3 + $0x10] sm:$0xff] %v473
  %506 = vst [vmem:[%s3 + $0x18] sm:$0xff] %v474
  %507 = vst [vmem:[%s3 + $0x20] sm:$0xff] %v475
  %508 = vst [vmem:[%s3 + $0x28] sm:$0xff] %v476
  %509 = vst [vmem:[%s3 + $0x30] sm:$0xff] %v477
  %510 = vst [vmem:[%s3 + $0x38] sm:$0xff] %v478
  %511 = vst [vmem:[%s3 + $0x40] sm:$0xff] %v479
  %512 = vst [vmem:[%s3 + $0x48] sm:$0xff] %v480
  %513 = vst [vmem:[%s3 + $0x50] sm:$0xff] %v481
  %514 = vst [vmem:[%s3 + $0x58] sm:$0xff] %v482
  %515 = vst [vmem:[%s3 + $0x60] sm:$0xff] %v483
  %516 = vst [vmem:[%s3 + $0x68] sm:$0xff] %v484
  %517 = vst [vmem:[%s3 + $0x70] sm:$0xff] %v485
  %518 = vst [vmem:[%s3 + $0x78] sm:$0xff] %v486
  // Predicated region
  $region14: #{decoder_rnn_forward.3} parent=0 // pred_check
    _
  $region15: #{decoder_rnn_forward.3} parent=0 // pred_check_branch
    %520 = sbr.rel (0) target = $region17
  $region16: #{decoder_rnn_forward.3} parent=0 // pred_region
    _
  $region17: #{decoder_rnn_forward.3} parent=0 // pred_fallthru
    _
  // Predicated region
  $region18: #{decoder_rnn_forward.3} parent=0 // pred_check
    _
  $region19: #{decoder_rnn_forward.3} parent=0 // pred_check_branch
    %522 = sbr.rel (0) target = $region21
  $region20: #{decoder_rnn_forward.3} parent=0 // pred_region
    _
  $region21: #{decoder_rnn_forward.3} parent=0 // pred_fallthru
    _

// kernel: decoder_rnn_forward.4
$region0: #{decoder_rnn_forward.4}
  #allocation0 [shape = 'u32[]', space=smem, size = 0x4, offset = 0x4, fixed_abs, tag = 'smem constant byte address 0x4 - core index']
  #allocation1 [shape = 'u32[144,128]{1,0:T(1,128)}', space=vmem, size = 0x12000, scoped, tag = 'internal scratch']
  #allocation2 [shape = 'f32[8,128]{1,0:T(8,128)}', space=vmem, size = 0x1000, scoped, tag = 'scratch operand']
  #allocation3 [shape = 'f32[8,128]{1,0:T(8,128)}', space=vmem, size = 0x1000, scoped, tag = 'scratch operand']
  %s0 = inlined_call_operand.vmem [shape: bf16[8,8,512], index: 0, kind: input, shape index: {}]
  %s1 = inlined_call_operand.vmem [shape: bf16[128,512], index: 1, kind: input, shape index: {}]
  %s2 = inlined_call_operand.vmem [shape: bf16[8,8,128], index: 2, kind: output, shape index: {}]
  %s3 = sld [smem:[#allocation0]]
  $region25: #{decoder_rnn_forward.4} parent=0
    _
  %s5 = ssub.s32 1, %s3
  %s6 = scalar_select 0, %s5, %s3
  // Predicated region
  $region2: #{decoder_rnn_forward.4} parent=0 // pred_check
    _
  $region3: #{decoder_rnn_forward.4} parent=0 // pred_check_branch
    %8 = sbr.rel (0) target = $region5
  $region4: #{decoder_rnn_forward.4} parent=0 // pred_region
    _
  $region5: #{decoder_rnn_forward.4} parent=0 // pred_fallthru
    _
  // Predicated region
  $region6: #{decoder_rnn_forward.4} parent=0 // pred_check
    _
  $region7: #{decoder_rnn_forward.4} parent=0 // pred_check_branch
    %10 = sbr.rel (0) target = $region9
  $region8: #{decoder_rnn_forward.4} parent=0 // pred_region
    _
  $region9: #{decoder_rnn_forward.4} parent=0 // pred_fallthru
    _
  %12 = vst [vmem:[#allocation2] sm:$0xff] 0.0
  %13 = vst [vmem:[#allocation3] sm:$0xff] 0.0
  %v14 = vld [vmem:[%s1] sm:$0xff]
  %v15 = vld [vmem:[%s1 + $0x8] sm:$0xff]
  %v16 = vld [vmem:[%s1 + $0x10] sm:$0xff]
  %v17 = vld [vmem:[%s1 + $0x18] sm:$0xff]
  %v18 = vld [vmem:[%s1 + $0x20] sm:$0xff]
  %v19 = vld [vmem:[%s1 + $0x28] sm:$0xff]
  %v20 = vld [vmem:[%s1 + $0x30] sm:$0xff]
  %v21 = vld [vmem:[%s1 + $0x38] sm:$0xff]
  %v22 = vld [vmem:[%s1 + $0x40] sm:$0xff]
  %v23 = vld [vmem:[%s1 + $0x48] sm:$0xff]
  %v24 = vld [vmem:[%s1 + $0x50] sm:$0xff]
  %v25 = vld [vmem:[%s1 + $0x58] sm:$0xff]
  %v26 = vld [vmem:[%s1 + $0x60] sm:$0xff]
  %v27 = vld [vmem:[%s1 + $0x68] sm:$0xff]
  %v28 = vld [vmem:[%s1 + $0x70] sm:$0xff]
  %v29 = vld [vmem:[%s1 + $0x78] sm:$0xff]
  %v30 = vld [vmem:[%s1 + $0x80] sm:$0xff]
  %v31 = vld [vmem:[%s1 + $0x88] sm:$0xff]
  %v32 = vld [vmem:[%s1 + $0x90] sm:$0xff]
  %v33 = vld [vmem:[%s1 + $0x98] sm:$0xff]
  %v34 = vld [vmem:[%s1 + $0xa0] sm:$0xff]
  %v35 = vld [vmem:[%s1 + $0xa8] sm:$0xff]
  %v36 = vld [vmem:[%s1 + $0xb0] sm:$0xff]
  %v37 = vld [vmem:[%s1 + $0xb8] sm:$0xff]
  %v38 = vld [vmem:[%s1 + $0xc0] sm:$0xff]
  %v39 = vld [vmem:[%s1 + $0xc8] sm:$0xff]
  %v40 = vld [vmem:[%s1 + $0xd0] sm:$0xff]
  %v41 = vld [vmem:[%s1 + $0xd8] sm:$0xff]
  %v42 = vld [vmem:[%s1 + $0xe0] sm:$0xff]
  %v43 = vld [vmem:[%s1 + $0xe8] sm:$0xff]
  %v44 = vld [vmem:[%s1 + $0xf0] sm:$0xff]
  %v45 = vld [vmem:[%s1 + $0xf8] sm:$0xff]
  loop: start=0, step=1, limit=8
  $region10: #{decoder_rnn_forward.4} parent=0 // loop_pre_header
    _
  $region11: #{decoder_rnn_forward.4} parent=0 // loop_header
    %s47 = sphi 0, %s51
    %p48 = scmp.ge.s32.totalorder %s47, 8
  $region12: #{decoder_rnn_forward.4} parent=0 // loop_header_branch
    %50 = sbr.rel (%p48) target = $region16
  $region13: #{decoder_rnn_forward.4} parent=0 // loop_body
    %v52 = vld [vmem:[#allocation2] sm:$0xff]
    %v53 = vld [vmem:[#allocation3] sm:$0xff]
    %s54 = smul.u32 %s47, 4
    %s55 = smul.addr %s54, 4
    %s56 = scalar_lea.vmem %s0, %s55
    %v57 = vld [vmem:[%s56] sm:$0xff]
    %v58 = vld [vmem:[%s56 + $0x8] sm:$0xff]
    %v59 = vunpack.c.l.bf16 %v57
    %v60 = vunpack.c.h.bf16 %v57
    %v61 = vunpack.c.l.bf16 %v58
    %v62 = vunpack.c.h.bf16 %v58
    %v63 = vpack.c.bf16 %v52, %v52
    %v96 = vunpack.c.l.b16 %v14
    %v97 = vunpack.c.h.b16 %v14
    %v98 = vunpack.c.l.b16 %v15
    %v99 = vunpack.c.h.b16 %v15
    %v100 = vunpack.c.l.b16 %v16
    %v101 = vunpack.c.h.b16 %v16
    %v102 = vunpack.c.l.b16 %v17
    %v103 = vunpack.c.h.b16 %v17
    %v104 = vunpack.c.l.b16 %v18
    %v105 = vunpack.c.h.b16 %v18
    %v106 = vunpack.c.l.b16 %v19
    %v107 = vunpack.c.h.b16 %v19
    %v108 = vunpack.c.l.b16 %v20
    %v109 = vunpack.c.h.b16 %v20
    %v110 = vunpack.c.l.b16 %v21
    %v111 = vunpack.c.h.b16 %v21
    %v112 = vunpack.c.l.b16 %v22
    %v113 = vunpack.c.h.b16 %v22
    %v114 = vunpack.c.l.b16 %v23
    %v115 = vunpack.c.h.b16 %v23
    %v116 = vunpack.c.l.b16 %v24
    %v117 = vunpack.c.h.b16 %v24
    %v118 = vunpack.c.l.b16 %v25
    %v119 = vunpack.c.h.b16 %v25
    %v120 = vunpack.c.l.b16 %v26
    %v121 = vunpack.c.h.b16 %v26
    %v122 = vunpack.c.l.b16 %v27
    %v123 = vunpack.c.h.b16 %v27
    %v124 = vunpack.c.l.b16 %v28
    %v125 = vunpack.c.h.b16 %v28
    %v126 = vunpack.c.l.b16 %v29
    %v127 = vunpack.c.h.b16 %v29
    %v128 = vunpack.c.l.b16 %v30
    %v129 = vunpack.c.h.b16 %v30
    %v130 = vunpack.c.l.b16 %v31
    %v131 = vunpack.c.h.b16 %v31
    %v132 = vunpack.c.l.b16 %v32
    %v133 = vunpack.c.h.b16 %v32
    %v134 = vunpack.c.l.b16 %v33
    %v135 = vunpack.c.h.b16 %v33
    %v136 = vunpack.c.l.b16 %v34
    %v137 = vunpack.c.h.b16 %v34
    %v138 = vunpack.c.l.b16 %v35
    %v139 = vunpack.c.h.b16 %v35
    %v140 = vunpack.c.l.b16 %v36
    %v141 = vunpack.c.h.b16 %v36
    %v142 = vunpack.c.l.b16 %v37
    %v143 = vunpack.c.h.b16 %v37
    %v144 = vunpack.c.l.b16 %v38
    %v145 = vunpack.c.h.b16 %v38
    %v146 = vunpack.c.l.b16 %v39
    %v147 = vunpack.c.h.b16 %v39
    %v148 = vunpack.c.l.b16 %v40
    %v149 = vunpack.c.h.b16 %v40
    %v150 = vunpack.c.l.b16 %v41
    %v151 = vunpack.c.h.b16 %v41
    %v152 = vunpack.c.l.b16 %v42
    %v153 = vunpack.c.h.b16 %v42
    %v154 = vunpack.c.l.b16 %v43
    %v155 = vunpack.c.h.b16 %v43
    %v156 = vunpack.c.l.b16 %v44
    %v157 = vunpack.c.h.b16 %v44
    %v158 = vunpack.c.l.b16 %v45
    %v159 = vunpack.c.h.b16 %v45
    %v160 = vpack.c.b16 %v100, %v96
    %v161 = vpack.c.b16 %v101, %v97
    %v162 = vpack.c.b16 %v102, %v98
    %v163 = vpack.c.b16 %v103, %v99
    %v164 = vpack.c.b16 %v108, %v104
    %v165 = vpack.c.b16 %v109, %v105
    %v166 = vpack.c.b16 %v110, %v106
    %v167 = vpack.c.b16 %v111, %v107
    %v168 = vpack.c.b16 %v116, %v112
    %v169 = vpack.c.b16 %v117, %v113
    %v170 = vpack.c.b16 %v118, %v114
    %v171 = vpack.c.b16 %v119, %v115
    %v172 = vpack.c.b16 %v124, %v120
    %v173 = vpack.c.b16 %v125, %v121
    %v174 = vpack.c.b16 %v126, %v122
    %v175 = vpack.c.b16 %v127, %v123
    %v176 = vpack.c.b16 %v132, %v128
    %v177 = vpack.c.b16 %v133, %v129
    %v178 = vpack.c.b16 %v134, %v130
    %v179 = vpack.c.b16 %v135, %v131
    %v180 = vpack.c.b16 %v140, %v136
    %v181 = vpack.c.b16 %v141, %v137
    %v182 = vpack.c.b16 %v142, %v138
    %v183 = vpack.c.b16 %v143, %v139
    %v184 = vpack.c.b16 %v148, %v144
    %v185 = vpack.c.b16 %v149, %v145
    %v186 = vpack.c.b16 %v150, %v146
    %v187 = vpack.c.b16 %v151, %v147
    %v188 = vpack.c.b16 %v156, %v152
    %v189 = vpack.c.b16 %v157, %v153
    %v190 = vpack.c.b16 %v158, %v154
    %v191 = vpack.c.b16 %v159, %v155
    %224 = vmatprep.subr.bf16.mxu0 %v161
    %225 = vmatpush1.bf16.msra.mxu0 %v160
    %226 = vmatprep.subr.bf16.mxu0 %v165
    %227 = vmatpush1.bf16.msra.mxu0 %v164
    %228 = vmatprep.subr.bf16.mxu0 %v169
    %229 = vmatpush1.bf16.msra.mxu0 %v168
    %230 = vmatprep.subr.bf16.mxu0 %v173
    %231 = vmatpush1.bf16.msra.mxu0 %v172
    %232 = vmatprep.subr.bf16.mxu0 %v177
    %233 = vmatpush1.bf16.msra.mxu0 %v176
    %234 = vmatprep.subr.bf16.mxu0 %v181
    %235 = vmatpush1.bf16.msra.mxu0 %v180
    %236 = vmatprep.subr.bf16.mxu0 %v185
    %237 = vmatpush1.bf16.msra.mxu0 %v184
    %238 = vmatprep.subr.bf16.mxu0 %v189
    %239 = vmatpush1.bf16.msra.mxu0 %v188
    %240 = vmatprep.subr.bf16.mxu0 0
    %241 = vmatpush1.bf16.msra.mxu0 0
    %242 = vmatprep.subr.bf16.mxu0 0
    %243 = vmatpush1.bf16.msra.mxu0 0
    %244 = vmatprep.subr.bf16.mxu0 0
    %245 = vmatpush1.bf16.msra.mxu0 0
    %246 = vmatprep.subr.bf16.mxu0 0
    %247 = vmatpush1.bf16.msra.mxu0 0
    %248 = vmatprep.subr.bf16.mxu0 0
    %249 = vmatpush1.bf16.msra.mxu0 0
    %250 = vmatprep.subr.bf16.mxu0 0
    %251 = vmatpush1.bf16.msra.mxu0 0
    %252 = vmatprep.subr.bf16.mxu0 0
    %253 = vmatpush1.bf16.msra.mxu0 0
    %254 = vmatprep.subr.bf16.mxu0 0
    %255 = vmatpush1.bf16.msra.mxu0 0
    %256 = vmatprep.mubr.bf16.mxu0 0
    %257 = vmatmul.mubr.bf16.gmra.mrb[0].mxu0 %v63
    %v258 = vpop.f32.mrb[0].mxu0
    %v259 = vadd.f32 0.0, %v258
    %v260 = vpop.f32.mrb[0].mxu0
    %v261 = vadd.f32 0.0, %v260
    %v262 = vpop.f32.mrb[0].mxu0
    %v263 = vpop.f32.mrb[0].mxu0
    %264 = vdwg.mxu0
    %265 = vmatprep.subr.bf16.mxu0 %v163
    %266 = vmatpush1.bf16.msra.mxu0 %v162
    %267 = vmatprep.subr.bf16.mxu0 %v167
    %268 = vmatpush1.bf16.msra.mxu0 %v166
    %269 = vmatprep.subr.bf16.mxu0 %v171
    %270 = vmatpush1.bf16.msra.mxu0 %v170
    %271 = vmatprep.subr.bf16.mxu0 %v175
    %272 = vmatpush1.bf16.msra.mxu0 %v174
    %273 = vmatprep.subr.bf16.mxu0 %v179
    %274 = vmatpush1.bf16.msra.mxu0 %v178
    %275 = vmatprep.subr.bf16.mxu0 %v183
    %276 = vmatpush1.bf16.msra.mxu0 %v182
    %277 = vmatprep.subr.bf16.mxu0 %v187
    %278 = vmatpush1.bf16.msra.mxu0 %v186
    %279 = vmatprep.subr.bf16.mxu0 %v191
    %280 = vmatpush1.bf16.msra.mxu0 %v190
    %281 = vmatprep.subr.bf16.mxu0 0
    %282 = vmatpush1.bf16.msra.mxu0 0
    %283 = vmatprep.subr.bf16.mxu0 0
    %284 = vmatpush1.bf16.msra.mxu0 0
    %285 = vmatprep.subr.bf16.mxu0 0
    %286 = vmatpush1.bf16.msra.mxu0 0
    %287 = vmatprep.subr.bf16.mxu0 0
    %288 = vmatpush1.bf16.msra.mxu0 0
    %289 = vmatprep.subr.bf16.mxu0 0
    %290 = vmatpush1.bf16.msra.mxu0 0
    %291 = vmatprep.subr.bf16.mxu0 0
    %292 = vmatpush1.bf16.msra.mxu0 0
    %293 = vmatprep.subr.bf16.mxu0 0
    %294 = vmatpush1.bf16.msra.mxu0 0
    %295 = vmatprep.subr.bf16.mxu0 0
    %296 = vmatpush1.bf16.msra.mxu0 0
    %297 = vmatprep.mubr.bf16.mxu0 0
    %298 = vmatmul.mubr.bf16.gmra.mrb[0].mxu0 %v63
    %v299 = vpop.f32.mrb[0].mxu0
    %v300 = vadd.f32 0.0, %v299
    %v301 = vpop.f32.mrb[0].mxu0
    %v302 = vadd.f32 0.0, %v301
    %v303 = vpop.f32.mrb[0].mxu0
    %v304 = vpop.f32.mrb[0].mxu0
    %305 = vdwg.mxu0
    %v306 = vadd.f32 %v59, %v259
    %v307 = vadd.f32 %v60, %v261
    %v308 = vadd.f32 %v61, %v300
    %v309 = vadd.f32 %v62, %v302
    %v310 = vxor.u32 %v306, 2147483648
    %v311 = vmul.f32 %v310, 1.442695
    %v312 = vpow.pop %v311
    %v313 = vadd.f32 %v312, 1.0
    %v314 = vrcp.pop %v313
    %v315 = vmul.f32 1.0, %v314
    %v316 = vxor.u32 %v307, 2147483648
    %v317 = vmul.f32 %v316, 1.442695
    %v318 = vpow.pop %v317
    %v319 = vadd.f32 %v318, 1.0
    %v320 = vrcp.pop %v319
    %v321 = vmul.f32 1.0, %v320
    %v322 = vtanh.pop %v308
    %v323 = vxor.u32 %v309, 2147483648
    %v324 = vmul.f32 %v323, 1.442695
    %v325 = vpow.pop %v324
    %v326 = vadd.f32 %v325, 1.0
    %v327 = vrcp.pop %v326
    %v328 = vmul.f32 1.0, %v327
    %v329 = vmul.f32 %v321, %v53
    %v330 = vmul.f32 %v315, %v322
    %v331 = vadd.f32 %v329, %v330
    %v332 = vtanh.pop %v331
    %v333 = vmul.f32 %v328, %v332
    %334 = vst [vmem:[#allocation2] sm:$0xff] %v333
    %335 = vst [vmem:[#allocation3] sm:$0xff] %v331
    %v336 = vpack.c.bf16 %v333, %v333
    %s337 = smul.addr %s47, 4
    %s338 = scalar_lea.vmem %s2, %s337
    %339 = vst [vmem:[%s338] sm:$0xf] %v336
  $region14: #{decoder_rnn_forward.4} parent=0 // loop_footer
    %s51 = sadd.s32 1, %s47
  $region15: #{decoder_rnn_forward.4} parent=0 // loop_footer_branch
    %46 = sbr.rel target = $region11
  $region16: #{decoder_rnn_forward.4} parent=0 // loop_exit
    _
  // Predicated region
  $region17: #{decoder_rnn_forward.4} parent=0 // pred_check
    _
  $region18: #{decoder_rnn_forward.4} parent=0 // pred_check_branch
    %341 = sbr.rel (0) target = $region20
  $region19: #{decoder_rnn_forward.4} parent=0 // pred_region
    _
  $region20: #{decoder_rnn_forward.4} parent=0 // pred_fallthru
    _
  // Predicated region
  $region21: #{decoder_rnn_forward.4} parent=0 // pred_check
    _
  $region22: #{decoder_rnn_forward.4} parent=0 // pred_check_branch
    %343 = sbr.rel (0) target = $region24
  $region23: #{decoder_rnn_forward.4} parent=0 // pred_region
    _
  $region24: #{decoder_rnn_forward.4} parent=0 // pred_fallthru
    _

</llo_original>
